<compile_context>
chip_gen: v5e
topology: v5e:2x2
jax: 0.10.0
libtpu: 0.0.40
codegen_flags: <defaults>
</compile_context>

<pallas_src>
import functools

import jax
import jax.numpy as jnp
from jax.experimental import pallas as pl
from jax.experimental.pallas import tpu as pltpu

# ----- BondEncoder config (matches ogb.utils.features.get_bond_feature_dims) ----
FULL_BOND_FEATURE_DIMS = (5, 6, 2)
NUM_FEATS = len(FULL_BOND_FEATURE_DIMS)
# Row-major strides of the combined (a, b, c) index: (12, 2, 1).
STRIDES = tuple(
    int(jnp.prod(jnp.array(FULL_BOND_FEATURE_DIMS[i + 1:] or (1,))))
    for i in range(NUM_FEATS)
)
COMB_VOCAB = 1
for _d in FULL_BOND_FEATURE_DIMS:
    COMB_VOCAB *= _d                      # 60 combined rows
V_PAD = 128                               # pad vocab to a full lane width / MXU pass


def _round_up(x, m):
    return ((x + m - 1) // m) * m


def _xavier_uniform(key, shape, dtype=jnp.float32):
    # torch.nn.init.xavier_uniform_ on a [num_emb, emb_dim] weight:
    # fan_in = emb_dim, fan_out = num_emb, bound = sqrt(6 / (fan_in + fan_out))
    fan_out, fan_in = shape
    bound = (6.0 / (fan_in + fan_out)) ** 0.5
    return jax.random.uniform(key, shape, dtype, minval=-bound, maxval=bound)


def make_bond_encoder_params(key, emb_dim):
    """The module's parameters: one f32 table per bond feature (torch-faithful)."""
    keys = jax.random.split(key, NUM_FEATS)
    return [
        _xavier_uniform(keys[i], (dim, emb_dim))
        for i, dim in enumerate(FULL_BOND_FEATURE_DIMS)
    ]


def combine_bond_tables(tables, dtype=jnp.bfloat16):
    """Pre-sum the per-feature tables into one [V_PAD, D] table (zero-padded)."""
    t0, t1, t2 = tables                                    # [5,D], [6,D], [2,D] f32
    comb = (t0[:, None, None, :] + t1[None, :, None, :] + t2[None, None, :, :])
    comb = comb.reshape(COMB_VOCAB, t0.shape[-1])           # [60, D], row = a*12+b*2+c
    comb = jnp.pad(comb, ((0, V_PAD - COMB_VOCAB), (0, 0)))  # zero rows, never hit
    return comb.astype(dtype)


# --------------------------- Pallas kernel ---------------------------
def _bond_encoder_kernel(idx_ref, table_ref, out_ref):
    # idx_ref:   [tile_e, 1]     int32  combined index (pad rows hold COMB_VOCAB)
    # table_ref: [V_PAD, D]      bf16   combined-sum embedding table
    # out_ref:   [tile_e, D]     out dtype
    idx = idx_ref[...]                                               # [tE, 1]
    iota = jax.lax.broadcasted_iota(jnp.int32, (1, V_PAD), 1)        # [1, 128]
    onehot = (idx == iota).astype(table_ref.dtype)                   # [tE, 128] bf16
    # sum of embedding lookups == onehot @ combined_table  (single MXU pass)
    out_ref[...] = jnp.dot(
        onehot, table_ref[...], preferred_element_type=jnp.float32
    ).astype(out_ref.dtype)


@functools.partial(jax.jit, static_argnames=("tile_e", "out_dtype"))
def bond_encoder_forward(edge_attr, comb_table, *, tile_e=2048,
                         out_dtype=jnp.float32):
    """edge_attr: [E, 3] int; comb_table: [V_PAD, D]; returns [E, D] out_dtype."""
    e, nf = edge_attr.shape
    assert nf == NUM_FEATS
    v_pad, emb_dim = comb_table.shape
    assert v_pad == V_PAD

    # Combined per-edge index (tiny elementwise XLA op): a*12 + b*2 + c.
    strides = jnp.array(STRIDES, dtype=jnp.int32)
    gidx = (edge_attr.astype(jnp.int32) * strides[None, :]).sum(axis=1)   # [E]

    # Tile selection: multiple of 8 (sublane), don't over-pad tiny inputs, and
    # keep >= 4 grid steps when there is enough work so both v7x TensorCores
    # get a share of the "parallel" axis (no-op on v5e/v6e).
    tile_e = max(8, min(tile_e, _round_up(e, 8)))
    if _round_up(e, 8) >= 4 * 8:
        tile_e = min(tile_e, _round_up((e + 3) // 4, 8))
    e_pad = _round_up(e, tile_e)

    # Padded tail rows point at a zero table row -> their output is exactly 0.
    gidx = jnp.pad(gidx, (0, e_pad - e), constant_values=COMB_VOCAB)
    idx_col = gidx.reshape(e_pad, 1)

    out = pl.pallas_call(
        _bond_encoder_kernel,
        out_shape=jax.ShapeDtypeStruct((e_pad, emb_dim), out_dtype),
        grid_spec=pltpu.PrefetchScalarGridSpec(
            num_scalar_prefetch=0,
            grid=(e_pad // tile_e,),
            in_specs=[
                pl.BlockSpec((tile_e, 1), lambda i: (i, 0)),
                pl.BlockSpec((V_PAD, emb_dim), lambda i: (0, 0)),
            ],
            out_specs=pl.BlockSpec((tile_e, emb_dim), lambda i: (i, 0)),
        ),
        compiler_params=pltpu.CompilerParams(
            dimension_semantics=("parallel",),   # shards grid across TCs on v7x
        ),
    )(idx_col, comb_table)

    # Only pay the slice copy when E is not tile-aligned; pass a tile-aligned E
    # (or consume the padded output, tail rows are exact zeros) to avoid it.
    return out[:e] if e_pad != e else out


# --------------------------- reference + demo ---------------------------
def bond_encoder_reference(edge_attr, tables):
    """Pure-JAX reference of the torch forward, in f32."""
    out = 0
    for i, t in enumerate(tables):
        out = out + jnp.take(t, edge_attr[:, i].astype(jnp.int32), axis=0)
    return out


if __name__ == "__main__":
    key = jax.random.PRNGKey(0)
    k_param, k_data = jax.random.split(key)

    emb_dim = 128          # multiple of 128 -> lane-dense (unmasked) output stores
    num_edges = 1000       # deliberately NOT a multiple of the tile (tests padding)

    tables = make_bond_encoder_params(k_param, emb_dim)          # 3 x f32 tables
    comb_table = combine_bond_tables(tables, dtype=jnp.bfloat16)  # [128, 128] bf16

    # deterministic edge_attr, each column bounded by its feature dim
    cols = []
    ks = jax.random.split(k_data, NUM_FEATS)
    for i, dim in enumerate(FULL_BOND_FEATURE_DIMS):
        cols.append(jax.random.randint(ks[i], (num_edges, 1), 0, dim,
                                       dtype=jnp.int32))
    edge_attr = jnp.concatenate(cols, axis=1)                     # [E, 3]

    out = bond_encoder_forward(edge_attr, comb_table, tile_e=2048)
    out = jax.block_until_ready(out)

    ref = bond_encoder_reference(edge_attr, tables)
    assert out.shape == (num_edges, emb_dim)
    # bf16 combined table -> ~2.5e-3 max abs deviation from the f32 reference.
    assert jnp.allclose(out, ref, atol=1e-2, rtol=1e-2), "mismatch vs reference"

    print("KERNEL_OK")
</pallas_src>

<mosaic_0001>
module attributes {stable_mosaic.version = 11 : i64} {
  func.func @_bond_encoder_kernel(%arg0: i32, %arg1: memref<256x1xi32, #tpu.memory_space<vmem>>, %arg2: memref<128x128xbf16, #tpu.memory_space<vmem>>, %arg3: memref<256x128xf32, #tpu.memory_space<vmem>>) attributes {dimension_semantics = [#tpu.dimension_semantics<parallel>], iteration_bounds = array<i64: 4>, scalar_prefetch = 0 : i64, scratch_operands = 0 : i64, tpu.core_type = #tpu.core_type<tc>, window_params = [{transform_indices = @transform_0, window_bounds = array<i64: 256, 1>}, {pipeline_mode = #tpu.pipeline_mode<synchronous>, transform_indices = @transform_1, window_bounds = array<i64: 128, 128>}, {transform_indices = @transform_2, window_bounds = array<i64: 256, 128>}]} {
    %c0 = arith.constant 0 : index
    %c0_0 = arith.constant 0 : index
    %0 = vector.load %arg1[%c0, %c0_0] : memref<256x1xi32, #tpu.memory_space<vmem>>, vector<256x1xi32>
    %1 = tpu.iota {dimensions = array<i32: 1>} : vector<1x128xi32>
    %2 = vector.broadcast %0 : vector<256x1xi32> to vector<256x128xi32>
    %3 = vector.broadcast %1 : vector<1x128xi32> to vector<256x128xi32>
    %4 = arith.cmpi eq, %2, %3 : vector<256x128xi32>
    %5 = arith.extui %4 : vector<256x128xi1> to vector<256x128xi32>
    %6 = arith.sitofp %5 : vector<256x128xi32> to vector<256x128xf32>
    %7 = arith.truncf %6 : vector<256x128xf32> to vector<256x128xbf16>
    %c0_1 = arith.constant 0 : index
    %c0_2 = arith.constant 0 : index
    %8 = vector.load %arg2[%c0_1, %c0_2] : memref<128x128xbf16, #tpu.memory_space<vmem>>, vector<128x128xbf16>
    %cst = arith.constant dense<0.000000e+00> : vector<256x128xf32>
    %9 = tpu.matmul %7, %8, %cst {dimension_numbers = #tpu.dot_dimension_numbers<[1], [0], [0], [1], [0, 0, 1, 1], [], []>} : vector<256x128xbf16>, vector<128x128xbf16>, vector<256x128xf32> -> vector<256x128xf32>
    %c0_3 = arith.constant 0 : index
    %c0_4 = arith.constant 0 : index
    %10 = vector.load %arg3[%c0_3, %c0_4] : memref<256x128xf32, #tpu.memory_space<vmem>>, vector<256x128xf32>
    tpu.vector_store %arg3[%c0_3, %c0_4], %9 {strides = array<i32>} : memref<256x128xf32, #tpu.memory_space<vmem>>, vector<256x128xf32>,
    return
  }
  func.func @transform_0(%arg0: i32) -> (i32, i32) {
    %c0_i32 = arith.constant 0 : i32
    %c0_i32_0 = arith.constant 0 : i32
    return %arg0, %c0_i32 : i32, i32
  }
  func.func @transform_1(%arg0: i32) -> (i32, i32) {
    %c0_i32 = arith.constant 0 : i32
    %c0_i32_0 = arith.constant 0 : i32
    %c0_i32_1 = arith.constant 0 : i32
    return %c0_i32, %c0_i32_0 : i32, i32
  }
  func.func @transform_2(%arg0: i32) -> (i32, i32) {
    %c0_i32 = arith.constant 0 : i32
    %c0_i32_0 = arith.constant 0 : i32
    return %arg0, %c0_i32 : i32, i32
  }
}

</mosaic_0001>

<llo_original>
// kernel: bond_encoder_forward.1
$region0: #{bond_encoder_forward.1}
  #allocation0 [shape = 'u32[]', space=smem, size = 0x4, offset = 0x4, fixed_abs, tag = 'smem constant byte address 0x4 - core index']
  #allocation1 [shape = 'u32[72,128]{1,0:T(1,128)}', space=vmem, size = 0x9000, scoped, tag = 'internal scratch']
  %s0 = inlined_call_operand.vmem [shape: s32[1024,1], index: 0, kind: input, shape index: {}]
  %s1 = inlined_call_operand.vmem [shape: bf16[128,128], index: 1, kind: input, shape index: {}]
  %s2 = inlined_call_operand.vmem [shape: f32[1024,128], index: 2, kind: output, shape index: {}]
  %s3 = sld [smem:[#allocation0]]
  $region41: #{bond_encoder_forward.1} parent=0
    _
  %s5 = ssub.s32 1, %s3
  %s6 = scalar_select 0, %s5, %s3
  loop: start=0, step=1, limit=6
  $region2: #{bond_encoder_forward.1} parent=0 // loop_pre_header
    _
  $region3: #{bond_encoder_forward.1} parent=0 // loop_header
    %s8 = sphi 0, %s12
    %p9 = scmp.ge.s32.totalorder %s8, 6
    %s18 = sphi 0, %s20
    %s21 = sphi 0, %s18
    %s22 = sphi 0, %s21
    %s38 = sphi 0, %s22
    %s42 = sphi 0, %s42
    %s44 = sphi 0, %s42
    %s45 = sphi 0, %s44
    %s59 = sphi 0, %s45
    %s65 = sphi 0, %s67
    %s68 = sphi 0, %s65
    %s69 = sphi 0, %s68
    %s85 = sphi 0, %s69
  $region4: #{bond_encoder_forward.1} parent=0 // loop_header_branch
    %11 = sbr.rel (%p9) target = $region8
  $region5: #{bond_encoder_forward.1} parent=0 // loop_body
    %s13 = ssub.s32 %s8, 1
    %s14 = ssub.s32 %s8, 2
    %s15 = sadd.s32 %s8, 1
    %s16 = ssub.s32 %s8, %s15
    %p17 = scmp.eq.s32.totalorder %s16, 0
    %s19 = sadd.s32 %s18, 1
    %s20 = scalar_select %p17, %s18, %s19
    %p23 = pneg %p17
    %p24 = scmp.eq.s32.totalorder %s8, 3
    %p25 = por %p23, %p24
    %p26 = scmp.ne.s32.totalorder %s18, %s21
    %p27 = scmp.eq.s32.totalorder %s8, 0
    %p28 = por %p26, %p27
    %p29 = scmp.ne.s32.totalorder %s18, %s21
    %p30 = scmp.eq.s32.totalorder %s13, 3
    %p31 = por %p29, %p30
    %p32 = scmp.ne.s32.totalorder %s21, %s22
    %p33 = scmp.eq.s32.totalorder %s13, 0
    %p34 = por %p32, %p33
    %p35 = scmp.ne.s32.totalorder %s21, %s22
    %p36 = scmp.eq.s32.totalorder %s14, 3
    %p37 = por %p35, %p36
    %p39 = scmp.ne.s32.totalorder %s22, %s38
    %p40 = scmp.eq.s32.totalorder %s14, 0
    %p41 = por %p39, %p40
    %s43 = sadd.s32 %s42, 1
    %p46 = scmp.eq.s32.totalorder %s8, 3
    %p47 = scmp.ne.s32.totalorder %s42, %s44
    %p48 = scmp.eq.s32.totalorder %s8, 0
    %p49 = por %p47, %p48
    %p50 = scmp.ne.s32.totalorder %s42, %s44
    %p51 = scmp.eq.s32.totalorder %s13, 3
    %p52 = por %p50, %p51
    %p53 = scmp.ne.s32.totalorder %s44, %s45
    %p54 = scmp.eq.s32.totalorder %s13, 0
    %p55 = por %p53, %p54
    %p56 = scmp.ne.s32.totalorder %s44, %s45
    %p57 = scmp.eq.s32.totalorder %s14, 3
    %p58 = por %p56, %p57
    %p60 = scmp.ne.s32.totalorder %s45, %s59
    %p61 = scmp.eq.s32.totalorder %s14, 0
    %p62 = por %p60, %p61
    %s63 = ssub.s32 %s8, %s15
    %p64 = scmp.eq.s32.totalorder %s63, 0
    %s66 = sadd.s32 %s65, 1
    %s67 = scalar_select %p64, %s65, %s66
    %p70 = pneg %p64
    %p71 = scmp.eq.s32.totalorder %s8, 3
    %p72 = por %p70, %p71
    %p73 = scmp.ne.s32.totalorder %s65, %s68
    %p74 = scmp.eq.s32.totalorder %s8, 0
    %p75 = por %p73, %p74
    %p76 = scmp.ne.s32.totalorder %s65, %s68
    %p77 = scmp.eq.s32.totalorder %s13, 3
    %p78 = por %p76, %p77
    %p79 = scmp.ne.s32.totalorder %s68, %s69
    %p80 = scmp.eq.s32.totalorder %s13, 0
    %p81 = por %p79, %p80
    %p82 = scmp.ne.s32.totalorder %s68, %s69
    %p83 = scmp.eq.s32.totalorder %s14, 3
    %p84 = por %p82, %p83
    %p86 = scmp.ne.s32.totalorder %s69, %s85
    %p87 = scmp.eq.s32.totalorder %s14, 0
    %p88 = por %p86, %p87
    %p89 = scmp.le.s32.totalorder 1, %s8
    %p90 = scmp.lt.s32.totalorder %s8, 5
    %p91 = pnand %p89, %p90
    %p92 = pneg %p91
    // Predicated region
    $region9: #{bond_encoder_forward.1} parent=5 // pred_check
      _
    $region10: #{bond_encoder_forward.1} parent=5 // pred_check_branch
      %94 = sbr.rel (%p91) target = $region12
    $region11: #{bond_encoder_forward.1} parent=5 // pred_region
      %s95 = ssub.s32 %s8, 1
      // Predicated region
      $region13: #{bond_encoder_forward.1} parent=11 // pred_check
        %p96 = pneg %p55
      $region14: #{bond_encoder_forward.1} parent=11 // pred_check_branch
        %98 = sbr.rel (%p96) target = $region16
      $region15: #{bond_encoder_forward.1} parent=11 // pred_region
        _
      $region16: #{bond_encoder_forward.1} parent=11 // pred_fallthru
        _
    $region12: #{bond_encoder_forward.1} parent=5 // pred_fallthru
      _
    %p99 = scmp.lt.s32.totalorder %s8, 4
    // Predicated region
    $region17: #{bond_encoder_forward.1} parent=5 // pred_check
      %p100 = pneg %p99
    $region18: #{bond_encoder_forward.1} parent=5 // pred_check_branch
      %102 = sbr.rel (%p100) target = $region20
    $region19: #{bond_encoder_forward.1} parent=5 // pred_region
      // Predicated region
      $region21: #{bond_encoder_forward.1} parent=19 // pred_check
        %p103 = pneg %p28
      $region22: #{bond_encoder_forward.1} parent=19 // pred_check_branch
        %105 = sbr.rel (%p103) target = $region24
      $region23: #{bond_encoder_forward.1} parent=19 // pred_region
        %s106 = smul.u32 32, %s8
        %p107 = scmp.lt.s32.totalorder %s106, 127
        %s108 = scalar_select %p107, %s106, 127
        %s109 = smul.addr %s108, 8
        %s110 = scalar_lea.vmem %s0, %s109
        %s111 = smul.u32 32, %s8
      $region24: #{bond_encoder_forward.1} parent=19 // pred_fallthru
        _
    $region20: #{bond_encoder_forward.1} parent=5 // pred_fallthru
      _
    %p112 = scmp.le.s32.totalorder 1, %s8
    %p113 = scmp.lt.s32.totalorder %s8, 5
    %p114 = pnand %p112, %p113
    %p115 = pneg %p114
    // Predicated region
    $region25: #{bond_encoder_forward.1} parent=5 // pred_check
      _
    $region26: #{bond_encoder_forward.1} parent=5 // pred_check_branch
      %117 = sbr.rel (%p114) target = $region28
    $region27: #{bond_encoder_forward.1} parent=5 // pred_region
      %s118 = ssub.s32 %s8, 1
      %s119 = smul.u32 32, %s13
      %p120 = scmp.lt.s32.totalorder %s119, 127
      %s121 = scalar_select %p120, %s119, 127
      %s122 = smul.addr %s121, 8
      %s123 = scalar_lea.vmem %s0, %s122
      %p124 = pneg %p34
      %p125 = pneg %p31
      %p126 = pneg %p55
      %p127 = pneg %p52
      %p128 = pneg %p81
      %p129 = pneg %p78
      %s130 = smul.u32 32, %s13
      %p131 = scmp.lt.s32.totalorder %s130, 127
      %s132 = scalar_select %p131, %s130, 127
      %s133 = smul.addr %s132, 8
      %s134 = scalar_lea.vmem %s2, %s133
      %s135 = smul.u32 32, %s13
      %p136 = scmp.lt.s32.totalorder %s135, 127
      %s137 = scalar_select %p136, %s135, 127
      %s138 = smul.addr %s137, 8
      %s139 = scalar_lea.vmem %s0, %s138
      %s140 = smul.u32 32, %s13
      %s141 = smul.u32 32, %s13
      %p142 = scmp.lt.s32.totalorder %s141, 127
      %s143 = scalar_select %p142, %s141, 127
      %s144 = smul.addr %s143, 8
      %s145 = scalar_lea.vmem %s2, %s144
      %s146 = smul.u32 32, %s13
      %v147 = vld [vmem:[%s139] sm:$0xff]
      %v148 = vld [vmem:[%s139 + $0x8] sm:$0xff]
      %v149 = vld [vmem:[%s139 + $0x10] sm:$0xff]
      %v150 = vld [vmem:[%s139 + $0x18] sm:$0xff]
      %v151 = vld [vmem:[%s139 + $0x20] sm:$0xff]
      %v152 = vld [vmem:[%s139 + $0x28] sm:$0xff]
      %v153 = vld [vmem:[%s139 + $0x30] sm:$0xff]
      %v154 = vld [vmem:[%s139 + $0x38] sm:$0xff]
      %v155 = vld [vmem:[%s139 + $0x40] sm:$0xff]
      %v156 = vld [vmem:[%s139 + $0x48] sm:$0xff]
      %v157 = vld [vmem:[%s139 + $0x50] sm:$0xff]
      %v158 = vld [vmem:[%s139 + $0x58] sm:$0xff]
      %v159 = vld [vmem:[%s139 + $0x60] sm:$0xff]
      %v160 = vld [vmem:[%s139 + $0x68] sm:$0xff]
      %v161 = vld [vmem:[%s139 + $0x70] sm:$0xff]
      %v162 = vld [vmem:[%s139 + $0x78] sm:$0xff]
      %v163 = vld [vmem:[%s139 + $0x80] sm:$0xff]
      %v164 = vld [vmem:[%s139 + $0x88] sm:$0xff]
      %v165 = vld [vmem:[%s139 + $0x90] sm:$0xff]
      %v166 = vld [vmem:[%s139 + $0x98] sm:$0xff]
      %v167 = vld [vmem:[%s139 + $0xa0] sm:$0xff]
      %v168 = vld [vmem:[%s139 + $0xa8] sm:$0xff]
      %v169 = vld [vmem:[%s139 + $0xb0] sm:$0xff]
      %v170 = vld [vmem:[%s139 + $0xb8] sm:$0xff]
      %v171 = vld [vmem:[%s139 + $0xc0] sm:$0xff]
      %v172 = vld [vmem:[%s139 + $0xc8] sm:$0xff]
      %v173 = vld [vmem:[%s139 + $0xd0] sm:$0xff]
      %v174 = vld [vmem:[%s139 + $0xd8] sm:$0xff]
      %v175 = vld [vmem:[%s139 + $0xe0] sm:$0xff]
      %v176 = vld [vmem:[%s139 + $0xe8] sm:$0xff]
      %v177 = vld [vmem:[%s139 + $0xf0] sm:$0xff]
      %v178 = vld [vmem:[%s139 + $0xf8] sm:$0xff]
      %v179 = vlaneseq
      %v180 = vand.u32 %v179, 127
      %181 = vset.pattern.permute.xlu0 0
      %182 = vperm.xlu0 %181, %v147
      %v183 = vpop.permute.xlu0 %182
      %184 = vset.pattern.permute.xlu0 0
      %185 = vperm.xlu0 %184, %v148
      %v186 = vpop.permute.xlu0 %185
      %187 = vset.pattern.permute.xlu0 0
      %188 = vperm.xlu0 %187, %v149
      %v189 = vpop.permute.xlu0 %188
      %190 = vset.pattern.permute.xlu0 0
      %191 = vperm.xlu0 %190, %v150
      %v192 = vpop.permute.xlu0 %191
      %193 = vset.pattern.permute.xlu0 0
      %194 = vperm.xlu0 %193, %v151
      %v195 = vpop.permute.xlu0 %194
      %196 = vset.pattern.permute.xlu0 0
      %197 = vperm.xlu0 %196, %v152
      %v198 = vpop.permute.xlu0 %197
      %199 = vset.pattern.permute.xlu0 0
      %200 = vperm.xlu0 %199, %v153
      %v201 = vpop.permute.xlu0 %200
      %202 = vset.pattern.permute.xlu0 0
      %203 = vperm.xlu0 %202, %v154
      %v204 = vpop.permute.xlu0 %203
      %205 = vset.pattern.permute.xlu0 0
      %206 = vperm.xlu0 %205, %v155
      %v207 = vpop.permute.xlu0 %206
      %208 = vset.pattern.permute.xlu0 0
      %209 = vperm.xlu0 %208, %v156
      %v210 = vpop.permute.xlu0 %209
      %211 = vset.pattern.permute.xlu0 0
      %212 = vperm.xlu0 %211, %v157
      %v213 = vpop.permute.xlu0 %212
      %214 = vset.pattern.permute.xlu0 0
      %215 = vperm.xlu0 %214, %v158
      %v216 = vpop.permute.xlu0 %215
      %217 = vset.pattern.permute.xlu0 0
      %218 = vperm.xlu0 %217, %v159
      %v219 = vpop.permute.xlu0 %218
      %220 = vset.pattern.permute.xlu0 0
      %221 = vperm.xlu0 %220, %v160
      %v222 = vpop.permute.xlu0 %221
      %223 = vset.pattern.permute.xlu0 0
      %224 = vperm.xlu0 %223, %v161
      %v225 = vpop.permute.xlu0 %224
      %226 = vset.pattern.permute.xlu0 0
      %227 = vperm.xlu0 %226, %v162
      %v228 = vpop.permute.xlu0 %227
      %229 = vset.pattern.permute.xlu0 0
      %230 = vperm.xlu0 %229, %v163
      %v231 = vpop.permute.xlu0 %230
      %232 = vset.pattern.permute.xlu0 0
      %233 = vperm.xlu0 %232, %v164
      %v234 = vpop.permute.xlu0 %233
      %235 = vset.pattern.permute.xlu0 0
      %236 = vperm.xlu0 %235, %v165
      %v237 = vpop.permute.xlu0 %236
      %238 = vset.pattern.permute.xlu0 0
      %239 = vperm.xlu0 %238, %v166
      %v240 = vpop.permute.xlu0 %239
      %241 = vset.pattern.permute.xlu0 0
      %242 = vperm.xlu0 %241, %v167
      %v243 = vpop.permute.xlu0 %242
      %244 = vset.pattern.permute.xlu0 0
      %245 = vperm.xlu0 %244, %v168
      %v246 = vpop.permute.xlu0 %245
      %247 = vset.pattern.permute.xlu0 0
      %248 = vperm.xlu0 %247, %v169
      %v249 = vpop.permute.xlu0 %248
      %250 = vset.pattern.permute.xlu0 0
      %251 = vperm.xlu0 %250, %v170
      %v252 = vpop.permute.xlu0 %251
      %253 = vset.pattern.permute.xlu0 0
      %254 = vperm.xlu0 %253, %v171
      %v255 = vpop.permute.xlu0 %254
      %256 = vset.pattern.permute.xlu0 0
      %257 = vperm.xlu0 %256, %v172
      %v258 = vpop.permute.xlu0 %257
      %259 = vset.pattern.permute.xlu0 0
      %260 = vperm.xlu0 %259, %v173
      %v261 = vpop.permute.xlu0 %260
      %262 = vset.pattern.permute.xlu0 0
      %263 = vperm.xlu0 %262, %v174
      %v264 = vpop.permute.xlu0 %263
      %265 = vset.pattern.permute.xlu0 0
      %266 = vperm.xlu0 %265, %v175
      %v267 = vpop.permute.xlu0 %266
      %268 = vset.pattern.permute.xlu0 0
      %269 = vperm.xlu0 %268, %v176
      %v270 = vpop.permute.xlu0 %269
      %271 = vset.pattern.permute.xlu0 0
      %272 = vperm.xlu0 %271, %v177
      %v273 = vpop.permute.xlu0 %272
      %274 = vset.pattern.permute.xlu0 0
      %275 = vperm.xlu0 %274, %v178
      %v276 = vpop.permute.xlu0 %275
      %vm277 = vcmp.eq.s32.totalorder %v183, %v180
      %vm278 = vcmp.eq.s32.totalorder %v186, %v180
      %vm279 = vcmp.eq.s32.totalorder %v189, %v180
      %vm280 = vcmp.eq.s32.totalorder %v192, %v180
      %vm281 = vcmp.eq.s32.totalorder %v195, %v180
      %vm282 = vcmp.eq.s32.totalorder %v198, %v180
      %vm283 = vcmp.eq.s32.totalorder %v201, %v180
      %vm284 = vcmp.eq.s32.totalorder %v204, %v180
      %vm285 = vcmp.eq.s32.totalorder %v207, %v180
      %vm286 = vcmp.eq.s32.totalorder %v210, %v180
      %vm287 = vcmp.eq.s32.totalorder %v213, %v180
      %vm288 = vcmp.eq.s32.totalorder %v216, %v180
      %vm289 = vcmp.eq.s32.totalorder %v219, %v180
      %vm290 = vcmp.eq.s32.totalorder %v222, %v180
      %vm291 = vcmp.eq.s32.totalorder %v225, %v180
      %vm292 = vcmp.eq.s32.totalorder %v228, %v180
      %vm293 = vcmp.eq.s32.totalorder %v231, %v180
      %vm294 = vcmp.eq.s32.totalorder %v234, %v180
      %vm295 = vcmp.eq.s32.totalorder %v237, %v180
      %vm296 = vcmp.eq.s32.totalorder %v240, %v180
      %vm297 = vcmp.eq.s32.totalorder %v243, %v180
      %vm298 = vcmp.eq.s32.totalorder %v246, %v180
      %vm299 = vcmp.eq.s32.totalorder %v249, %v180
      %vm300 = vcmp.eq.s32.totalorder %v252, %v180
      %vm301 = vcmp.eq.s32.totalorder %v255, %v180
      %vm302 = vcmp.eq.s32.totalorder %v258, %v180
      %vm303 = vcmp.eq.s32.totalorder %v261, %v180
      %vm304 = vcmp.eq.s32.totalorder %v264, %v180
      %vm305 = vcmp.eq.s32.totalorder %v267, %v180
      %vm306 = vcmp.eq.s32.totalorder %v270, %v180
      %vm307 = vcmp.eq.s32.totalorder %v273, %v180
      %vm308 = vcmp.eq.s32.totalorder %v276, %v180
      %v309 = vsel %vm277, 1, 0
      %v310 = vsel %vm278, 1, 0
      %v311 = vsel %vm279, 1, 0
      %v312 = vsel %vm280, 1, 0
      %v313 = vsel %vm281, 1, 0
      %v314 = vsel %vm282, 1, 0
      %v315 = vsel %vm283, 1, 0
      %v316 = vsel %vm284, 1, 0
      %v317 = vsel %vm285, 1, 0
      %v318 = vsel %vm286, 1, 0
      %v319 = vsel %vm287, 1, 0
      %v320 = vsel %vm288, 1, 0
      %v321 = vsel %vm289, 1, 0
      %v322 = vsel %vm290, 1, 0
      %v323 = vsel %vm291, 1, 0
      %v324 = vsel %vm292, 1, 0
      %v325 = vsel %vm293, 1, 0
      %v326 = vsel %vm294, 1, 0
      %v327 = vsel %vm295, 1, 0
      %v328 = vsel %vm296, 1, 0
      %v329 = vsel %vm297, 1, 0
      %v330 = vsel %vm298, 1, 0
      %v331 = vsel %vm299, 1, 0
      %v332 = vsel %vm300, 1, 0
      %v333 = vsel %vm301, 1, 0
      %v334 = vsel %vm302, 1, 0
      %v335 = vsel %vm303, 1, 0
      %v336 = vsel %vm304, 1, 0
      %v337 = vsel %vm305, 1, 0
      %v338 = vsel %vm306, 1, 0
      %v339 = vsel %vm307, 1, 0
      %v340 = vsel %vm308, 1, 0
      %v341 = vcvt.s32.f32 %v309
      %v342 = vcvt.s32.f32 %v310
      %v343 = vcvt.s32.f32 %v311
      %v344 = vcvt.s32.f32 %v312
      %v345 = vcvt.s32.f32 %v313
      %v346 = vcvt.s32.f32 %v314
      %v347 = vcvt.s32.f32 %v315
      %v348 = vcvt.s32.f32 %v316
      %v349 = vcvt.s32.f32 %v317
      %v350 = vcvt.s32.f32 %v318
      %v351 = vcvt.s32.f32 %v319
      %v352 = vcvt.s32.f32 %v320
      %v353 = vcvt.s32.f32 %v321
      %v354 = vcvt.s32.f32 %v322
      %v355 = vcvt.s32.f32 %v323
      %v356 = vcvt.s32.f32 %v324
      %v357 = vcvt.s32.f32 %v325
      %v358 = vcvt.s32.f32 %v326
      %v359 = vcvt.s32.f32 %v327
      %v360 = vcvt.s32.f32 %v328
      %v361 = vcvt.s32.f32 %v329
      %v362 = vcvt.s32.f32 %v330
      %v363 = vcvt.s32.f32 %v331
      %v364 = vcvt.s32.f32 %v332
      %v365 = vcvt.s32.f32 %v333
      %v366 = vcvt.s32.f32 %v334
      %v367 = vcvt.s32.f32 %v335
      %v368 = vcvt.s32.f32 %v336
      %v369 = vcvt.s32.f32 %v337
      %v370 = vcvt.s32.f32 %v338
      %v371 = vcvt.s32.f32 %v339
      %v372 = vcvt.s32.f32 %v340
      %v373 = vpack.c.bf16 %v342, %v341
      %v374 = vpack.c.bf16 %v344, %v343
      %v375 = vpack.c.bf16 %v346, %v345
      %v376 = vpack.c.bf16 %v348, %v347
      %v377 = vpack.c.bf16 %v350, %v349
      %v378 = vpack.c.bf16 %v352, %v351
      %v379 = vpack.c.bf16 %v354, %v353
      %v380 = vpack.c.bf16 %v356, %v355
      %v381 = vpack.c.bf16 %v358, %v357
      %v382 = vpack.c.bf16 %v360, %v359
      %v383 = vpack.c.bf16 %v362, %v361
      %v384 = vpack.c.bf16 %v364, %v363
      %v385 = vpack.c.bf16 %v366, %v365
      %v386 = vpack.c.bf16 %v368, %v367
      %v387 = vpack.c.bf16 %v370, %v369
      %v388 = vpack.c.bf16 %v372, %v371
      %v389 = vld [vmem:[%s1] sm:$0xf]
      %v390 = vld [vmem:[%s1 + $0x4] sm:$0xf]
      %v391 = vld [vmem:[%s1 + $0x8] sm:$0xf]
      %v392 = vld [vmem:[%s1 + $0xc] sm:$0xf]
      %v393 = vld [vmem:[%s1 + $0x10] sm:$0xf]
      %v394 = vld [vmem:[%s1 + $0x14] sm:$0xf]
      %v395 = vld [vmem:[%s1 + $0x18] sm:$0xf]
      %v396 = vld [vmem:[%s1 + $0x1c] sm:$0xf]
      %v397 = vld [vmem:[%s1 + $0x20] sm:$0xf]
      %v398 = vld [vmem:[%s1 + $0x24] sm:$0xf]
      %v399 = vld [vmem:[%s1 + $0x28] sm:$0xf]
      %v400 = vld [vmem:[%s1 + $0x2c] sm:$0xf]
      %v401 = vld [vmem:[%s1 + $0x30] sm:$0xf]
      %v402 = vld [vmem:[%s1 + $0x34] sm:$0xf]
      %v403 = vld [vmem:[%s1 + $0x38] sm:$0xf]
      %v404 = vld [vmem:[%s1 + $0x3c] sm:$0xf]
      %v421 = vunpack.c.l.b16 %v389
      %v422 = vunpack.c.l.b16 %v390
      %v423 = vunpack.c.l.b16 %v391
      %v424 = vunpack.c.l.b16 %v392
      %v425 = vunpack.c.l.b16 %v393
      %v426 = vunpack.c.l.b16 %v394
      %v427 = vunpack.c.l.b16 %v395
      %v428 = vunpack.c.l.b16 %v396
      %v429 = vunpack.c.l.b16 %v397
      %v430 = vunpack.c.l.b16 %v398
      %v431 = vunpack.c.l.b16 %v399
      %v432 = vunpack.c.l.b16 %v400
      %v433 = vunpack.c.l.b16 %v401
      %v434 = vunpack.c.l.b16 %v402
      %v435 = vunpack.c.l.b16 %v403
      %v436 = vunpack.c.l.b16 %v404
      %v437 = vpack.c.b16 %v422, %v421
      %v438 = vpack.c.b16 %v424, %v423
      %v439 = vpack.c.b16 %v426, %v425
      %v440 = vpack.c.b16 %v428, %v427
      %v441 = vpack.c.b16 %v430, %v429
      %v442 = vpack.c.b16 %v432, %v431
      %v443 = vpack.c.b16 %v434, %v433
      %v444 = vpack.c.b16 %v436, %v435
      %453 = vmatpush.bf16.msra.mxu0 %v444
      %454 = vmatpush.bf16.msra.mxu0 %v443
      %455 = vmatpush.bf16.msra.mxu0 %v442
      %456 = vmatpush.bf16.msra.mxu0 %v441
      %457 = vmatpush.bf16.msra.mxu0 %v440
      %458 = vmatpush.bf16.msra.mxu0 %v439
      %459 = vmatpush.bf16.msra.mxu0 %v438
      %460 = vmatpush.bf16.msra.mxu0 %v437
      %461 = vmatmul.bf16.gmra.mxu0 %v373
      %v462 = vpop.f32.mrf.mxu0
      %v463 = vadd.f32 0.0, %v462
      %v464 = vpop.f32.mrf.mxu0
      %v465 = vadd.f32 0.0, %v464
      %466 = vmatmul.bf16.gmra.mxu0 %v374
      %v467 = vpop.f32.mrf.mxu0
      %v468 = vadd.f32 0.0, %v467
      %v469 = vpop.f32.mrf.mxu0
      %v470 = vadd.f32 0.0, %v469
      %471 = vmatmul.bf16.gmra.mxu0 %v375
      %v472 = vpop.f32.mrf.mxu0
      %v473 = vadd.f32 0.0, %v472
      %v474 = vpop.f32.mrf.mxu0
      %v475 = vadd.f32 0.0, %v474
      %476 = vmatmul.bf16.gmra.mxu0 %v376
      %v477 = vpop.f32.mrf.mxu0
      %v478 = vadd.f32 0.0, %v477
      %v479 = vpop.f32.mrf.mxu0
      %v480 = vadd.f32 0.0, %v479
      %481 = vmatmul.bf16.gmra.mxu0 %v377
      %v482 = vpop.f32.mrf.mxu0
      %v483 = vadd.f32 0.0, %v482
      %v484 = vpop.f32.mrf.mxu0
      %v485 = vadd.f32 0.0, %v484
      %486 = vmatmul.bf16.gmra.mxu0 %v378
      %v487 = vpop.f32.mrf.mxu0
      %v488 = vadd.f32 0.0, %v487
      %v489 = vpop.f32.mrf.mxu0
      %v490 = vadd.f32 0.0, %v489
      %491 = vmatmul.bf16.gmra.mxu0 %v379
      %v492 = vpop.f32.mrf.mxu0
      %v493 = vadd.f32 0.0, %v492
      %v494 = vpop.f32.mrf.mxu0
      %v495 = vadd.f32 0.0, %v494
      %496 = vmatmul.bf16.gmra.mxu0 %v380
      %v497 = vpop.f32.mrf.mxu0
      %v498 = vadd.f32 0.0, %v497
      %v499 = vpop.f32.mrf.mxu0
      %v500 = vadd.f32 0.0, %v499
      %501 = vmatmul.bf16.gmra.mxu0 %v381
      %v502 = vpop.f32.mrf.mxu0
      %v503 = vadd.f32 0.0, %v502
      %v504 = vpop.f32.mrf.mxu0
      %v505 = vadd.f32 0.0, %v504
      %506 = vmatmul.bf16.gmra.mxu0 %v382
      %v507 = vpop.f32.mrf.mxu0
      %v508 = vadd.f32 0.0, %v507
      %v509 = vpop.f32.mrf.mxu0
      %v510 = vadd.f32 0.0, %v509
      %511 = vmatmul.bf16.gmra.mxu0 %v383
      %v512 = vpop.f32.mrf.mxu0
      %v513 = vadd.f32 0.0, %v512
      %v514 = vpop.f32.mrf.mxu0
      %v515 = vadd.f32 0.0, %v514
      %516 = vmatmul.bf16.gmra.mxu0 %v384
      %v517 = vpop.f32.mrf.mxu0
      %v518 = vadd.f32 0.0, %v517
      %v519 = vpop.f32.mrf.mxu0
      %v520 = vadd.f32 0.0, %v519
      %521 = vmatmul.bf16.gmra.mxu0 %v385
      %v522 = vpop.f32.mrf.mxu0
      %v523 = vadd.f32 0.0, %v522
      %v524 = vpop.f32.mrf.mxu0
      %v525 = vadd.f32 0.0, %v524
      %526 = vmatmul.bf16.gmra.mxu0 %v386
      %v527 = vpop.f32.mrf.mxu0
      %v528 = vadd.f32 0.0, %v527
      %v529 = vpop.f32.mrf.mxu0
      %v530 = vadd.f32 0.0, %v529
      %531 = vmatmul.bf16.gmra.mxu0 %v387
      %v532 = vpop.f32.mrf.mxu0
      %v533 = vadd.f32 0.0, %v532
      %v534 = vpop.f32.mrf.mxu0
      %v535 = vadd.f32 0.0, %v534
      %536 = vmatmul.bf16.gmra.mxu0 %v388
      %v537 = vpop.f32.mrf.mxu0
      %v538 = vadd.f32 0.0, %v537
      %v539 = vpop.f32.mrf.mxu0
      %v540 = vadd.f32 0.0, %v539
      %541 = vdwg.mxu0
      %542 = vst [vmem:[%s145] sm:$0xff] %v463
      %543 = vst [vmem:[%s145 + $0x8] sm:$0xff] %v465
      %544 = vst [vmem:[%s145 + $0x10] sm:$0xff] %v468
      %545 = vst [vmem:[%s145 + $0x18] sm:$0xff] %v470
      %546 = vst [vmem:[%s145 + $0x20] sm:$0xff] %v473
      %547 = vst [vmem:[%s145 + $0x28] sm:$0xff] %v475
      %548 = vst [vmem:[%s145 + $0x30] sm:$0xff] %v478
      %549 = vst [vmem:[%s145 + $0x38] sm:$0xff] %v480
      %550 = vst [vmem:[%s145 + $0x40] sm:$0xff] %v483
      %551 = vst [vmem:[%s145 + $0x48] sm:$0xff] %v485
      %552 = vst [vmem:[%s145 + $0x50] sm:$0xff] %v488
      %553 = vst [vmem:[%s145 + $0x58] sm:$0xff] %v490
      %554 = vst [vmem:[%s145 + $0x60] sm:$0xff] %v493
      %555 = vst [vmem:[%s145 + $0x68] sm:$0xff] %v495
      %556 = vst [vmem:[%s145 + $0x70] sm:$0xff] %v498
      %557 = vst [vmem:[%s145 + $0x78] sm:$0xff] %v500
      %558 = vst [vmem:[%s145 + $0x80] sm:$0xff] %v503
      %559 = vst [vmem:[%s145 + $0x88] sm:$0xff] %v505
      %560 = vst [vmem:[%s145 + $0x90] sm:$0xff] %v508
      %561 = vst [vmem:[%s145 + $0x98] sm:$0xff] %v510
      %562 = vst [vmem:[%s145 + $0xa0] sm:$0xff] %v513
      %563 = vst [vmem:[%s145 + $0xa8] sm:$0xff] %v515
      %564 = vst [vmem:[%s145 + $0xb0] sm:$0xff] %v518
      %565 = vst [vmem:[%s145 + $0xb8] sm:$0xff] %v520
      %566 = vst [vmem:[%s145 + $0xc0] sm:$0xff] %v523
      %567 = vst [vmem:[%s145 + $0xc8] sm:$0xff] %v525
      %568 = vst [vmem:[%s145 + $0xd0] sm:$0xff] %v528
      %569 = vst [vmem:[%s145 + $0xd8] sm:$0xff] %v530
      %570 = vst [vmem:[%s145 + $0xe0] sm:$0xff] %v533
      %571 = vst [vmem:[%s145 + $0xe8] sm:$0xff] %v535
      %572 = vst [vmem:[%s145 + $0xf0] sm:$0xff] %v538
      %573 = vst [vmem:[%s145 + $0xf8] sm:$0xff] %v540
      %s574 = smul.u32 32, %s13
      %p575 = scmp.lt.s32.totalorder %s574, 127
      %s576 = scalar_select %p575, %s574, 127
      %s577 = smul.addr %s576, 8
      %s578 = scalar_lea.vmem %s2, %s577
      // Predicated region
      $region29: #{bond_encoder_forward.1} parent=27 // pred_check
        %p579 = pneg %p78
      $region30: #{bond_encoder_forward.1} parent=27 // pred_check_branch
        %581 = sbr.rel (%p579) target = $region32
      $region31: #{bond_encoder_forward.1} parent=27 // pred_region
        %s582 = smul.u32 32, %s13
      $region32: #{bond_encoder_forward.1} parent=27 // pred_fallthru
        _
    $region28: #{bond_encoder_forward.1} parent=5 // pred_fallthru
      _
    %p583 = scmp.le.s32.totalorder 2, %s8
    // Predicated region
    $region33: #{bond_encoder_forward.1} parent=5 // pred_check
      %p584 = pneg %p583
    $region34: #{bond_encoder_forward.1} parent=5 // pred_check_branch
      %586 = sbr.rel (%p584) target = $region36
    $region35: #{bond_encoder_forward.1} parent=5 // pred_region
      %s587 = ssub.s32 %s8, 2
      // Predicated region
      $region37: #{bond_encoder_forward.1} parent=35 // pred_check
        %p588 = pneg %p84
      $region38: #{bond_encoder_forward.1} parent=35 // pred_check_branch
        %590 = sbr.rel (%p588) target = $region40
      $region39: #{bond_encoder_forward.1} parent=35 // pred_region
        %s591 = smul.u32 32, %s14
        %p592 = scmp.lt.s32.totalorder %s591, 127
        %s593 = scalar_select %p592, %s591, 127
        %s594 = smul.addr %s593, 8
        %s595 = scalar_lea.vmem %s2, %s594
      $region40: #{bond_encoder_forward.1} parent=35 // pred_fallthru
        _
    $region36: #{bond_encoder_forward.1} parent=5 // pred_fallthru
      _
  $region6: #{bond_encoder_forward.1} parent=0 // loop_footer
    %s12 = sadd.s32 1, %s8
  $region7: #{bond_encoder_forward.1} parent=0 // loop_footer_branch
    %7 = sbr.rel target = $region3
  $region8: #{bond_encoder_forward.1} parent=0 // loop_exit
    _

</llo_original>
